<compile_context>
chip_gen: v7x
topology: tpu7x:2x2x1
jax: 0.10.0
libtpu: 0.0.40
codegen_flags: <defaults>
</compile_context>

<pallas_src>
import math
from functools import partial

import jax
import jax.numpy as jnp
from jax.experimental import pallas as pl
from jax.experimental.pallas import tpu as pltpu

LANE = 128


def _round_up(x, m):
    return ((x + m - 1) // m) * m


def _vmem_limit_bytes():
    """Scoped-VMEM limit sized per TPU generation (v7x has only 64 MiB/core)."""
    try:
        cap = int(pltpu.get_tpu_info().vmem_capacity_bytes)
    except Exception:
        cap = 64 << 20  # conservative default == v7x per-TensorCore VMEM
    # -> ~48 MiB on v7x (64 MiB physical), 96 MiB on v5e/v6e (128 MiB physical).
    return int(min(cap * 3 // 4, 96 << 20))


def _row_budget(Din, Dp, Ep, N, vmem_limit):
    """Max tile rows from a per-row working-set estimate (incl. 2x I/O buffers)."""
    per_row = (2 * 2 * Din            # x block, bf16, double-buffered
               + (4 + 2) * 3 * Dp     # qkv f32 + single bf16 copy
               + (4 + 4 + 2) * N      # scores f32 + attn f32 + attn bf16
               + (4 + 2) * Dp         # heads f32 + bf16
               + 2 * 2 * Ep           # out block, bf16, double-buffered
               + 8)                   # mask rows (amortised)
    fixed = 2 * (2 * Din * 3 * Dp + 2 * Dp * Ep + 4 * Ep)   # weights + bias
    budget = vmem_limit - fixed - (4 << 20)                 # compiler headroom
    return max(8, min(8192, budget // per_row))


def _pick_batch_tile(B, N, max_rows):
    divs = [d for d in range(1, B + 1) if B % d == 0]
    # (rows, feature) blocks need rows % 8 == 0 unless the block spans the array.
    legal = [d for d in divs if (d * N) % 8 == 0 or d == B]
    viable = [d for d in legal if d * N <= max_rows] or [legal[0]]
    # Keep >= 2 grid steps when possible so v7x's second TensorCore gets work.
    multi = [d for d in viable if d <= B // 2]
    pool = multi if multi else viable
    pool16 = [d for d in pool if (d * N) % 16 == 0]   # bf16 packed-sublane friendly
    return max(pool16) if pool16 else max(pool)


def _mha_kernel(x_ref, wqkv_ref, wo_ref, bo_ref, mask_ref, out_ref, *, Dp, neg_val):
    """One grid step handles a tile of Bt batch elements.

    x_ref   : (Bt*N, Din)   bf16 flattened input rows (q == h in the reference)
    wqkv_ref: (Din, 3*Dp)   bf16 fused [Wq*1/sqrt(d) | Wk | Wv]^T (unpadded Din)
    wo_ref  : (Dp, Ep)      bf16 W_out^T (padded to lanes)
    bo_ref  : (1, Ep)       f32  W_out bias (padded)
    mask_ref: (Bt, 1, N)    f32, 1.0 == attention not possible (per key)
    out_ref : (Bt*N, Ep)    bf16 lane-dense output slab
    """
    Bt, _, N = mask_ref.shape
    rows = x_ref.shape[0]  # Bt * N

    # Fused Q/K/V projection: one wide MXU pass over every row of the tile.
    qkv = jnp.dot(x_ref[...], wqkv_ref[...],
                  preferred_element_type=jnp.float32)            # (rows, 3*Dp) f32
    qkv_bf = qkv.astype(jnp.bfloat16)                            # single cast
    Q = qkv_bf[:, 0 * Dp:1 * Dp].reshape(Bt, N, Dp)
    K = qkv_bf[:, 1 * Dp:2 * Dp].reshape(Bt, N, Dp)
    V = qkv_bf[:, 2 * Dp:3 * Dp].reshape(Bt, N, Dp)

    # scores[b,q,k] = Q[b,q,:] . K[b,k,:]   (1/sqrt(key_dim) folded into Wq).
    scores = jnp.einsum("bqd,bkd->bqk", Q, K,
                        preferred_element_type=jnp.float32)      # (Bt, N, N)

    # Key mask broadcast over query rows; hoisted once and reused twice.
    m_b = jnp.broadcast_to(mask_ref[...], scores.shape) != 0.0
    # NOTE: with evaluate=True (neg_val = -inf) a fully-masked row goes through
    # NaN in softmax and is then zeroed by the post-softmax select, matching
    # the PyTorch reference (attnc[mask] = 0 on an all-masked row).
    scores = jnp.where(m_b, jnp.float32(neg_val), scores)

    # Numerically-stable softmax over keys, f32 VPU/EUP math.
    scores = scores - jnp.max(scores, axis=-1, keepdims=True)
    e = jnp.exp(scores)
    attn = e * pl.reciprocal(jnp.sum(e, axis=-1, keepdims=True), approx=True)
    attn = jnp.where(m_b, jnp.float32(0.0), attn)                # attnc[mask] = 0

    # heads = attn @ V ; out = heads @ W_out^T + b_out
    heads = jnp.einsum("bqk,bkd->bqd", attn.astype(jnp.bfloat16), V,
                       preferred_element_type=jnp.float32)       # (Bt, N, Dp)
    out = jnp.dot(heads.reshape(rows, Dp).astype(jnp.bfloat16), wo_ref[...],
                  preferred_element_type=jnp.float32) + bo_ref[...]
    out_ref[...] = out.astype(out_ref.dtype)                     # bf16 writeback


def multi_head_attention(q, mask, params, *, evaluate=False, batch_tile=None):
    """q: (B, N, Din) f32; mask: (B, N) {0,1} (1 = not attendable).

    params = (Wq^T, Wk^T, Wv^T, Wo^T, b_out) with shapes
             (Din, key_dim), (Din, key_dim), (Din, val_dim), (key_dim, E), (1, E).
    """
    B, N, Din = q.shape
    wq_t, wk_t, wv_t, wo_t, bo = params
    key_dim = wq_t.shape[1]
    val_dim = wv_t.shape[1]
    embed_dim = wo_t.shape[1]
    assert key_dim == val_dim, "reference forward requires key_dim == val_dim (n_heads == 1)"
    norm_factor = 1.0 / math.sqrt(key_dim)

    Dp = _round_up(key_dim, LANE)
    Ep = _round_up(embed_dim, LANE)

    def pad_cols(w, c):
        return jnp.pad(w, ((0, 0), (0, c - w.shape[1])))

    # Fold 1/sqrt(key_dim) into Wq, fuse Q/K/V weights; pad only the output-
    # feature (lane) dims -> contraction dim Din stays unpadded in HBM.
    wqkv = jnp.concatenate(
        [pad_cols(wq_t * norm_factor, Dp),
         pad_cols(wk_t, Dp),
         pad_cols(wv_t, Dp)], axis=1).astype(jnp.bfloat16)           # (Din, 3*Dp)
    wo_p = jnp.pad(wo_t, ((0, Dp - key_dim),
                          (0, Ep - embed_dim))).astype(jnp.bfloat16)  # (Dp, Ep)
    bo_p = jnp.pad(bo.reshape(1, -1),
                   ((0, 0), (0, Ep - embed_dim))).astype(jnp.float32)  # (1, Ep)

    # Flattened activations, bf16, NO Din padding (last block dim == full dim).
    x_flat = q.reshape(B * N, Din).astype(jnp.bfloat16)
    mask_f = (mask != 0).reshape(B, 1, N).astype(jnp.float32)  # 1.0 == masked

    vmem_limit = _vmem_limit_bytes()
    max_rows = _row_budget(Din, Dp, Ep, N, vmem_limit)
    Bt = _pick_batch_tile(B, N, max_rows) if batch_tile is None else batch_tile
    assert B % Bt == 0
    rows = Bt * N

    kernel = partial(_mha_kernel, Dp=Dp,
                     neg_val=(float("-inf") if evaluate else -30.0))

    out_flat = pl.pallas_call(
        kernel,
        out_shape=jax.ShapeDtypeStruct((B * N, Ep), jnp.bfloat16),
        grid_spec=pltpu.PrefetchScalarGridSpec(
            num_scalar_prefetch=0,
            grid=(B // Bt,),
            in_specs=[
                pl.BlockSpec((rows, Din), lambda b: (b, 0)),         # x rows (unpadded Din)
                pl.BlockSpec((Din, 3 * Dp), lambda b: (0, 0)),       # fused Wqkv
                pl.BlockSpec((Dp, Ep), lambda b: (0, 0)),            # Wo^T
                pl.BlockSpec((1, Ep), lambda b: (0, 0)),             # b_out
                pl.BlockSpec((Bt, 1, N), lambda b: (b, 0, 0)),       # mask (f32)
            ],
            out_specs=pl.BlockSpec((rows, Ep), lambda b: (b, 0)),    # lane-dense bf16 slab
        ),
        compiler_params=pltpu.CompilerParams(
            dimension_semantics=("parallel",),      # batch tiles independent (v7x 2 TCs)
            vmem_limit_bytes=vmem_limit),
    )(x_flat, wqkv, wo_p, bo_p, mask_f)

    return out_flat[:, :embed_dim].astype(jnp.float32).reshape(B, N, embed_dim)


if __name__ == "__main__":
    # n_heads must be 1 for the reference forward to be well-formed (see header).
    B, N, Din, E = 2, 8, 32, 32
    n_heads = 1
    key_dim = val_dim = E // n_heads

    key = jax.random.PRNGKey(0)
    k = jax.random.split(key, 7)

    q = jax.random.normal(k[0], (B, N, Din), jnp.float32)
    # 1.0 == attention not possible (negative adjacency), same convention as torch.
    mask = (jax.random.uniform(k[1], (B, N)) > 0.7).astype(jnp.float32)

    def uinit(kk, shape, stdv):
        return jax.random.uniform(kk, shape, jnp.float32, -stdv, stdv)

    # Deterministic param init matching the module's uniform(-1/sqrt(fan_in_last), ...)
    wq_t = uinit(k[2], (Din, key_dim), 1.0 / math.sqrt(Din))     # W_query.weight^T
    wk_t = uinit(k[3], (Din, key_dim), 1.0 / math.sqrt(Din))     # W_key.weight^T
    wv_t = uinit(k[4], (Din, val_dim), 1.0 / math.sqrt(Din))     # W_val.weight^T
    wo_t = uinit(k[5], (key_dim, E), 1.0 / math.sqrt(key_dim))   # W_out.weight^T
    bo = uinit(k[6], (1, E), 1.0 / math.sqrt(E))                 # W_out.bias

    out = multi_head_attention(q, mask, (wq_t, wk_t, wv_t, wo_t, bo), evaluate=False)
    out = jax.block_until_ready(out)
    assert out.shape == (B, N, E)

    # Pure-JAX f32 reference (same semantics as the torch forward with n_heads=1).
    Q = q @ wq_t
    K = q @ wk_t
    V = q @ wv_t
    sc = (1.0 / math.sqrt(key_dim)) * jnp.einsum("bnd,bmd->bnm", Q, K)
    mb = (mask != 0)[:, None, :]
    sc = jnp.where(mb, -30.0, sc)
    attn = jax.nn.softmax(sc, axis=-1)
    attn = jnp.where(mb, 0.0, attn)
    ref = jnp.einsum("bnm,bmd->bnd", attn, V) @ wo_t + bo[0]

    # bf16 MXU operands / bf16 writeback + approx reciprocal -> relaxed tolerance.
    err = jnp.max(jnp.abs(out - ref))
    assert jnp.allclose(out, ref, atol=6e-2, rtol=6e-2), f"mismatch vs reference (max |err|={err})"
    print("KERNEL_OK")
</pallas_src>

<mosaic_0001>
module attributes {stable_mosaic.version = 11 : i64} {
  func.func @_mha_kernel(%arg0: i32, %arg1: memref<8x32xbf16, #tpu.memory_space<vmem>>, %arg2: memref<32x384xbf16, #tpu.memory_space<vmem>>, %arg3: memref<128x128xbf16, #tpu.memory_space<vmem>>, %arg4: memref<1x128xf32, #tpu.memory_space<vmem>>, %arg5: memref<1x1x8xf32, #tpu.memory_space<vmem>>, %arg6: memref<8x128xbf16, #tpu.memory_space<vmem>>) attributes {dimension_semantics = [#tpu.dimension_semantics<parallel>], iteration_bounds = array<i64: 2>, scalar_prefetch = 0 : i64, scratch_operands = 0 : i64, tpu.core_type = #tpu.core_type<tc>, window_params = [{transform_indices = @transform_0, window_bounds = array<i64: 8, 32>}, {pipeline_mode = #tpu.pipeline_mode<synchronous>, transform_indices = @transform_1, window_bounds = array<i64: 32, 384>}, {pipeline_mode = #tpu.pipeline_mode<synchronous>, transform_indices = @transform_2, window_bounds = array<i64: 128, 128>}, {pipeline_mode = #tpu.pipeline_mode<synchronous>, transform_indices = @transform_3, window_bounds = array<i64: 1, 128>}, {transform_indices = @transform_4, window_bounds = array<i64: 1, 1, 8>}, {transform_indices = @transform_5, window_bounds = array<i64: 8, 128>}]} {
    %c0 = arith.constant 0 : index
    %c0_0 = arith.constant 0 : index
    %0 = vector.load %arg1[%c0, %c0_0] : memref<8x32xbf16, #tpu.memory_space<vmem>>, vector<8x32xbf16>
    %c0_1 = arith.constant 0 : index
    %c0_2 = arith.constant 0 : index
    %1 = vector.load %arg2[%c0_1, %c0_2] : memref<32x384xbf16, #tpu.memory_space<vmem>>, vector<32x384xbf16>
    %cst = arith.constant dense<0.000000e+00> : vector<8x384xf32>
    %2 = tpu.matmul %0, %1, %cst {dimension_numbers = #tpu.dot_dimension_numbers<[1], [0], [0], [1], [0, 0, 1, 1], [], []>} : vector<8x32xbf16>, vector<32x384xbf16>, vector<8x384xf32> -> vector<8x384xf32>
    %3 = arith.truncf %2 : vector<8x384xf32> to vector<8x384xbf16>
    %4 = vector.extract_strided_slice %3 {offsets = [0, 0], sizes = [8, 128], strides = [1, 1]} : vector<8x384xbf16> to vector<8x128xbf16>
    %5 = vector.shape_cast %4 : vector<8x128xbf16> to vector<1x8x128xbf16>
    %6 = vector.extract_strided_slice %3 {offsets = [0, 128], sizes = [8, 128], strides = [1, 1]} : vector<8x384xbf16> to vector<8x128xbf16>
    %7 = vector.shape_cast %6 : vector<8x128xbf16> to vector<1x8x128xbf16>
    %8 = vector.extract_strided_slice %3 {offsets = [0, 256], sizes = [8, 128], strides = [1, 1]} : vector<8x384xbf16> to vector<8x128xbf16>
    %9 = vector.shape_cast %8 : vector<8x128xbf16> to vector<1x8x128xbf16>
    "tpu.trace_start"() <{level = 10 : i32, message = "bqd,bkd->bqk"}> : () -> ()
    %cst_3 = arith.constant dense<0.000000e+00> : vector<1x8x8xf32>
    %10 = tpu.matmul %5, %7, %cst_3 {dimension_numbers = #tpu.dot_dimension_numbers<[2], [2], [1], [1], [0, 0, 0, 1, 1, 1], [0], [0]>} : vector<1x8x128xbf16>, vector<1x8x128xbf16>, vector<1x8x8xf32> -> vector<1x8x8xf32>
    "tpu.trace_stop"() : () -> ()
    %c0_4 = arith.constant 0 : index
    %c0_5 = arith.constant 0 : index
    %c0_6 = arith.constant 0 : index
    %11 = vector.load %arg5[%c0_4, %c0_5, %c0_6] : memref<1x1x8xf32, #tpu.memory_space<vmem>>, vector<1x1x8xf32>
    %12 = vector.shape_cast %11 : vector<1x1x8xf32> to vector<1x1x8xf32>
    %13 = vector.broadcast %12 : vector<1x1x8xf32> to vector<1x8x8xf32>
    %cst_7 = arith.constant 0.000000e+00 : f32
    %14 = vector.broadcast %cst_7 : f32 to vector<1x8x8xf32>
    %15 = arith.cmpf one, %13, %14 : vector<1x8x8xf32>
    %cst_8 = arith.constant -3.000000e+01 : f32
    %16 = vector.broadcast %cst_8 : f32 to vector<1x8x8xf32>
    %17 = arith.select %15, %16, %10 : vector<1x8x8xi1>, vector<1x8x8xf32>
    %cst_9 = arith.constant dense<0xFF800000> : vector<1x8xf32>
    %18 = vector.multi_reduction <maximumf>, %17, %cst_9 [2] : vector<1x8x8xf32> to vector<1x8xf32>
    %19 = vector.shape_cast %18 : vector<1x8xf32> to vector<1x8x1xf32>
    %20 = vector.broadcast %19 : vector<1x8x1xf32> to vector<1x8x8xf32>
    %21 = arith.subf %17, %20 : vector<1x8x8xf32>
    %22 = math.exp %21 : vector<1x8x8xf32>
    %cst_10 = arith.constant dense<0.000000e+00> : vector<1x8xf32>
    %23 = vector.multi_reduction <add>, %22, %cst_10 [2] : vector<1x8x8xf32> to vector<1x8xf32>
    %24 = vector.shape_cast %23 : vector<1x8xf32> to vector<1x8x1xf32>
    %25 = tpu.reciprocal %24 {approx = true} : vector<1x8x1xf32> -> vector<1x8x1xf32>
    %26 = vector.broadcast %25 : vector<1x8x1xf32> to vector<1x8x8xf32>
    %27 = arith.mulf %22, %26 : vector<1x8x8xf32>
    %cst_11 = arith.constant 0.000000e+00 : f32
    %28 = vector.broadcast %cst_11 : f32 to vector<1x8x8xf32>
    %29 = arith.select %15, %28, %27 : vector<1x8x8xi1>, vector<1x8x8xf32>
    %30 = arith.truncf %29 : vector<1x8x8xf32> to vector<1x8x8xbf16>
    "tpu.trace_start"() <{level = 10 : i32, message = "bqk,bkd->bqd"}> : () -> ()
    %cst_12 = arith.constant dense<0.000000e+00> : vector<1x8x128xf32>
    %31 = tpu.matmul %30, %9, %cst_12 {dimension_numbers = #tpu.dot_dimension_numbers<[2], [1], [1], [2], [0, 0, 0, 1, 1, 2], [0], [0]>} : vector<1x8x8xbf16>, vector<1x8x128xbf16>, vector<1x8x128xf32> -> vector<1x8x128xf32>
    "tpu.trace_stop"() : () -> ()
    %32 = vector.shape_cast %31 : vector<1x8x128xf32> to vector<8x128xf32>
    %33 = arith.truncf %32 : vector<8x128xf32> to vector<8x128xbf16>
    %c0_13 = arith.constant 0 : index
    %c0_14 = arith.constant 0 : index
    %34 = vector.load %arg3[%c0_13, %c0_14] : memref<128x128xbf16, #tpu.memory_space<vmem>>, vector<128x128xbf16>
    %cst_15 = arith.constant dense<0.000000e+00> : vector<8x128xf32>
    %35 = tpu.matmul %33, %34, %cst_15 {dimension_numbers = #tpu.dot_dimension_numbers<[1], [0], [0], [1], [0, 0, 1, 1], [], []>} : vector<8x128xbf16>, vector<128x128xbf16>, vector<8x128xf32> -> vector<8x128xf32>
    %c0_16 = arith.constant 0 : index
    %c0_17 = arith.constant 0 : index
    %36 = vector.load %arg4[%c0_16, %c0_17] : memref<1x128xf32, #tpu.memory_space<vmem>>, vector<1x128xf32>
    %37 = vector.broadcast %36 : vector<1x128xf32> to vector<8x128xf32>
    %38 = arith.addf %35, %37 : vector<8x128xf32>
    %39 = arith.truncf %38 : vector<8x128xf32> to vector<8x128xbf16>
    %c0_18 = arith.constant 0 : index
    %c0_19 = arith.constant 0 : index
    %40 = vector.load %arg6[%c0_18, %c0_19] : memref<8x128xbf16, #tpu.memory_space<vmem>>, vector<8x128xbf16>
    tpu.vector_store %arg6[%c0_18, %c0_19], %39 {strides = array<i32>} : memref<8x128xbf16, #tpu.memory_space<vmem>>, vector<8x128xbf16>,
    return
  }
  func.func @transform_0(%arg0: i32) -> (i32, i32) {
    %c0_i32 = arith.constant 0 : i32
    %c0_i32_0 = arith.constant 0 : i32
    return %arg0, %c0_i32 : i32, i32
  }
  func.func @transform_1(%arg0: i32) -> (i32, i32) {
    %c0_i32 = arith.constant 0 : i32
    %c0_i32_0 = arith.constant 0 : i32
    %c0_i32_1 = arith.constant 0 : i32
    return %c0_i32, %c0_i32_0 : i32, i32
  }
  func.func @transform_2(%arg0: i32) -> (i32, i32) {
    %c0_i32 = arith.constant 0 : i32
    %c0_i32_0 = arith.constant 0 : i32
    %c0_i32_1 = arith.constant 0 : i32
    return %c0_i32, %c0_i32_0 : i32, i32
  }
  func.func @transform_3(%arg0: i32) -> (i32, i32) {
    %c0_i32 = arith.constant 0 : i32
    %c0_i32_0 = arith.constant 0 : i32
    %c0_i32_1 = arith.constant 0 : i32
    return %c0_i32, %c0_i32_0 : i32, i32
  }
  func.func @transform_4(%arg0: i32) -> (i32, i32, i32) {
    %c0_i32 = arith.constant 0 : i32
    %c0_i32_0 = arith.constant 0 : i32
    %c0_i32_1 = arith.constant 0 : i32
    return %arg0, %c0_i32, %c0_i32_0 : i32, i32, i32
  }
  func.func @transform_5(%arg0: i32) -> (i32, i32) {
    %c0_i32 = arith.constant 0 : i32
    %c0_i32_0 = arith.constant 0 : i32
    return %arg0, %c0_i32 : i32, i32
  }
}

</mosaic_0001>

<llo_original>
// kernel: tpu_custom_call.1
$region0: #{tpu_custom_call.1}
  #allocation0 [shape = 'u32[]', space=smem, size = 0x4, offset = 0x4, fixed_abs, tag = 'smem constant byte address 0x4 - core index']
  #allocation1 [shape = 'u32[144,128]{1,0:T(1,128)}', space=vmem, size = 0x12000, scoped, tag = 'internal scratch']
  %s0 = inlined_call_operand.hbm [shape: bf16[16,32], index: 0, kind: input, shape index: {}]
  %s1 = inlined_call_operand.hbm [shape: bf16[32,384], index: 1, kind: input, shape index: {}]
  %s2 = inlined_call_operand.hbm [shape: bf16[128,128], index: 2, kind: input, shape index: {}]
  %s3 = inlined_call_operand.vmem [shape: f32[1,128], index: 3, kind: input, shape index: {}]
  %s4 = inlined_call_operand.vmem [shape: f32[2,1,8], index: 4, kind: input, shape index: {}]
  %s5 = inlined_call_operand.hbm [shape: bf16[16,128], index: 5, kind: output, shape index: {}]
  %s6 = sld [smem:[#allocation0]]
  $region65: #{tpu_custom_call.1} parent=0
    _
  %s8 = ssub.s32 1, %s6
  %s9 = scalar_select 0, %s8, %s6
  $region1: #{tpu_custom_call.1} parent=0
    #allocation2 [shape = 'u8[4096]{0}', space=vmem, size = 0x1000, scoped, tag = 'input window, operand 0']
    #allocation3 [shape = 's32[2]{0}', space=sflag, size = 0x8, scoped, tag = 'scoped memory for tpu_custom_call.1']
    #allocation4 [shape = 's32[2]{0}', space=sflag, size = 0x8, scoped, tag = 'scoped memory for tpu_custom_call.1']
    #allocation5 [shape = 'u8[24576]{0}', space=vmem, size = 0x6000, scoped, tag = 'input window, operand 1, single buffered']
    #allocation6 [shape = 's32[1]{0}', space=sflag, size = 0x4, scoped, tag = 'scoped memory for tpu_custom_call.1']
    #allocation7 [shape = 'u8[32768]{0}', space=vmem, size = 0x8000, scoped, tag = 'input window, operand 2, single buffered']
    #allocation8 [shape = 'u8[4096]{0}', space=vmem, size = 0x1000, scoped, tag = 'output window, operand 0']
    %10 = vsyncpa [#allocation3], 0
    %s11 = scalar_lea.sflag [#allocation3], 1
    %12 = vsyncpa %s11, 0
    %13 = vsyncpa [#allocation6], 0
    %14 = vsyncpa [#allocation4], 0
    %s15 = scalar_lea.sflag [#allocation4], 1
    %16 = vsyncpa %s15, 0
    loop: start=0, step=1, limit=4
    $region2: #{tpu_custom_call.1} parent=1 // loop_pre_header
      _
    $region3: #{tpu_custom_call.1} parent=1 // loop_header
      %s18 = sphi 0, %s22
      %p19 = scmp.ge.s32.totalorder %s18, 4
      %s28 = sphi 0, %s30
      %s31 = sphi 0, %s28
      %s32 = sphi 0, %s31
      %s48 = sphi 0, %s32
      %s52 = sphi 0, %s52
      %s54 = sphi 0, %s52
      %s55 = sphi 0, %s54
      %s69 = sphi 0, %s55
      %s73 = sphi 0, %s73
      %s75 = sphi 0, %s73
      %s76 = sphi 0, %s75
      %s90 = sphi 0, %s76
      %s94 = sphi 0, %s94
      %s96 = sphi 0, %s94
      %s97 = sphi 0, %s96
      %s111 = sphi 0, %s97
      %s117 = sphi 0, %s119
      %s120 = sphi 0, %s117
      %s121 = sphi 0, %s120
      %s137 = sphi 0, %s121
      %s143 = sphi 0, %s145
      %s146 = sphi 0, %s143
      %s147 = sphi 0, %s146
      %s163 = sphi 0, %s147
    $region4: #{tpu_custom_call.1} parent=1 // loop_header_branch
      %21 = sbr.rel (%p19) target = $region8
    $region5: #{tpu_custom_call.1} parent=1 // loop_body
      %s23 = ssub.s32 %s18, 1
      %s24 = ssub.s32 %s18, 2
      %s25 = sadd.s32 %s18, 1
      %s26 = ssub.s32 %s18, %s25
      %p27 = scmp.eq.s32.totalorder %s26, 0
      %s29 = sadd.s32 %s28, 1
      %s30 = scalar_select %p27, %s28, %s29
      %p33 = pneg %p27
      %p34 = scmp.eq.s32.totalorder %s18, 1
      %p35 = por %p33, %p34
      %p36 = scmp.ne.s32.totalorder %s28, %s31
      %p37 = scmp.eq.s32.totalorder %s18, 0
      %p38 = por %p36, %p37
      %p39 = scmp.ne.s32.totalorder %s28, %s31
      %p40 = scmp.eq.s32.totalorder %s23, 1
      %p41 = por %p39, %p40
      %p42 = scmp.ne.s32.totalorder %s31, %s32
      %p43 = scmp.eq.s32.totalorder %s23, 0
      %p44 = por %p42, %p43
      %p45 = scmp.ne.s32.totalorder %s31, %s32
      %p46 = scmp.eq.s32.totalorder %s24, 1
      %p47 = por %p45, %p46
      %p49 = scmp.ne.s32.totalorder %s32, %s48
      %p50 = scmp.eq.s32.totalorder %s24, 0
      %p51 = por %p49, %p50
      %s53 = sadd.s32 %s52, 1
      %p56 = scmp.eq.s32.totalorder %s18, 1
      %p57 = scmp.ne.s32.totalorder %s52, %s54
      %p58 = scmp.eq.s32.totalorder %s18, 0
      %p59 = por %p57, %p58
      %p60 = scmp.ne.s32.totalorder %s52, %s54
      %p61 = scmp.eq.s32.totalorder %s23, 1
      %p62 = por %p60, %p61
      %p63 = scmp.ne.s32.totalorder %s54, %s55
      %p64 = scmp.eq.s32.totalorder %s23, 0
      %p65 = por %p63, %p64
      %p66 = scmp.ne.s32.totalorder %s54, %s55
      %p67 = scmp.eq.s32.totalorder %s24, 1
      %p68 = por %p66, %p67
      %p70 = scmp.ne.s32.totalorder %s55, %s69
      %p71 = scmp.eq.s32.totalorder %s24, 0
      %p72 = por %p70, %p71
      %s74 = sadd.s32 %s73, 1
      %p77 = scmp.eq.s32.totalorder %s18, 1
      %p78 = scmp.ne.s32.totalorder %s73, %s75
      %p79 = scmp.eq.s32.totalorder %s18, 0
      %p80 = por %p78, %p79
      %p81 = scmp.ne.s32.totalorder %s73, %s75
      %p82 = scmp.eq.s32.totalorder %s23, 1
      %p83 = por %p81, %p82
      %p84 = scmp.ne.s32.totalorder %s75, %s76
      %p85 = scmp.eq.s32.totalorder %s23, 0
      %p86 = por %p84, %p85
      %p87 = scmp.ne.s32.totalorder %s75, %s76
      %p88 = scmp.eq.s32.totalorder %s24, 1
      %p89 = por %p87, %p88
      %p91 = scmp.ne.s32.totalorder %s76, %s90
      %p92 = scmp.eq.s32.totalorder %s24, 0
      %p93 = por %p91, %p92
      %s95 = sadd.s32 %s94, 1
      %p98 = scmp.eq.s32.totalorder %s18, 1
      %p99 = scmp.ne.s32.totalorder %s94, %s96
      %p100 = scmp.eq.s32.totalorder %s18, 0
      %p101 = por %p99, %p100
      %p102 = scmp.ne.s32.totalorder %s94, %s96
      %p103 = scmp.eq.s32.totalorder %s23, 1
      %p104 = por %p102, %p103
      %p105 = scmp.ne.s32.totalorder %s96, %s97
      %p106 = scmp.eq.s32.totalorder %s23, 0
      %p107 = por %p105, %p106
      %p108 = scmp.ne.s32.totalorder %s96, %s97
      %p109 = scmp.eq.s32.totalorder %s24, 1
      %p110 = por %p108, %p109
      %p112 = scmp.ne.s32.totalorder %s97, %s111
      %p113 = scmp.eq.s32.totalorder %s24, 0
      %p114 = por %p112, %p113
      %s115 = ssub.s32 %s18, %s25
      %p116 = scmp.eq.s32.totalorder %s115, 0
      %s118 = sadd.s32 %s117, 1
      %s119 = scalar_select %p116, %s117, %s118
      %p122 = pneg %p116
      %p123 = scmp.eq.s32.totalorder %s18, 1
      %p124 = por %p122, %p123
      %p125 = scmp.ne.s32.totalorder %s117, %s120
      %p126 = scmp.eq.s32.totalorder %s18, 0
      %p127 = por %p125, %p126
      %p128 = scmp.ne.s32.totalorder %s117, %s120
      %p129 = scmp.eq.s32.totalorder %s23, 1
      %p130 = por %p128, %p129
      %p131 = scmp.ne.s32.totalorder %s120, %s121
      %p132 = scmp.eq.s32.totalorder %s23, 0
      %p133 = por %p131, %p132
      %p134 = scmp.ne.s32.totalorder %s120, %s121
      %p135 = scmp.eq.s32.totalorder %s24, 1
      %p136 = por %p134, %p135
      %p138 = scmp.ne.s32.totalorder %s121, %s137
      %p139 = scmp.eq.s32.totalorder %s24, 0
      %p140 = por %p138, %p139
      %s141 = ssub.s32 %s18, %s25
      %p142 = scmp.eq.s32.totalorder %s141, 0
      %s144 = sadd.s32 %s143, 1
      %s145 = scalar_select %p142, %s143, %s144
      %p148 = pneg %p142
      %p149 = scmp.eq.s32.totalorder %s18, 1
      %p150 = por %p148, %p149
      %p151 = scmp.ne.s32.totalorder %s143, %s146
      %p152 = scmp.eq.s32.totalorder %s18, 0
      %p153 = por %p151, %p152
      %p154 = scmp.ne.s32.totalorder %s143, %s146
      %p155 = scmp.eq.s32.totalorder %s23, 1
      %p156 = por %p154, %p155
      %p157 = scmp.ne.s32.totalorder %s146, %s147
      %p158 = scmp.eq.s32.totalorder %s23, 0
      %p159 = por %p157, %p158
      %p160 = scmp.ne.s32.totalorder %s146, %s147
      %p161 = scmp.eq.s32.totalorder %s24, 1
      %p162 = por %p160, %p161
      %p164 = scmp.ne.s32.totalorder %s147, %s163
      %p165 = scmp.eq.s32.totalorder %s24, 0
      %p166 = por %p164, %p165
      %p167 = scmp.le.s32.totalorder 1, %s18
      %p168 = scmp.lt.s32.totalorder %s18, 3
      %p169 = pnand %p167, %p168
      %p170 = pneg %p169
      // Predicated region
      $region9: #{tpu_custom_call.1} parent=5 // pred_check
        _
      $region10: #{tpu_custom_call.1} parent=5 // pred_check_branch
        %172 = sbr.rel (%p169) target = $region12
      $region11: #{tpu_custom_call.1} parent=5 // pred_region
        %s173 = ssub.s32 %s18, 1
        // Predicated region
        $region13: #{tpu_custom_call.1} parent=11 // pred_check
          %p174 = pneg %p65
        $region14: #{tpu_custom_call.1} parent=11 // pred_check_branch
          %176 = sbr.rel (%p174) target = $region16
        $region15: #{tpu_custom_call.1} parent=11 // pred_region
          %s178 = ssub.s32 768, 768
          %179 = vsyncadd [#allocation6], %s178
          %s180 = sshll.u32 [#allocation5], 4
          %s181 = int_to_ptr.vmem [resolvable:$true] %s180
          %186 = dma.hbm_to_vmem [thread:$0]  %s1, 768, %s181, [#allocation6], 192, 192, 12
        $region16: #{tpu_custom_call.1} parent=11 // pred_fallthru
          _
        // Predicated region
        $region17: #{tpu_custom_call.1} parent=11 // pred_check
          %p187 = pneg %p86
        $region18: #{tpu_custom_call.1} parent=11 // pred_check_branch
          %189 = sbr.rel (%p187) target = $region20
        $region19: #{tpu_custom_call.1} parent=11 // pred_region
          %s191 = ssub.s32 1024, 1024
          %192 = vsyncadd [#allocation6], %s191
          %s193 = sshll.u32 [#allocation7], 4
          %s194 = int_to_ptr.vmem [resolvable:$true] %s193
          %199 = dma.hbm_to_vmem [thread:$0]  %s2, 1024, %s194, [#allocation6], 64, 64, 4
        $region20: #{tpu_custom_call.1} parent=11 // pred_fallthru
          _
        // Predicated region
        $region21: #{tpu_custom_call.1} parent=11 // pred_check
          %p200 = pneg %p107
        $region22: #{tpu_custom_call.1} parent=11 // pred_check_branch
          %202 = sbr.rel (%p200) target = $region24
        $region23: #{tpu_custom_call.1} parent=11 // pred_region
          _
        $region24: #{tpu_custom_call.1} parent=11 // pred_fallthru
          _
      $region12: #{tpu_custom_call.1} parent=5 // pred_fallthru
        _
      %p203 = scmp.lt.s32.totalorder %s18, 2
      // Predicated region
      $region25: #{tpu_custom_call.1} parent=5 // pred_check
        %p204 = pneg %p203
      $region26: #{tpu_custom_call.1} parent=5 // pred_check_branch
        %206 = sbr.rel (%p204) target = $region28
      $region27: #{tpu_custom_call.1} parent=5 // pred_region
        // Predicated region
        $region29: #{tpu_custom_call.1} parent=27 // pred_check
          %p207 = pneg %p38
        $region30: #{tpu_custom_call.1} parent=27 // pred_check_branch
          %209 = sbr.rel (%p207) target = $region32
        $region31: #{tpu_custom_call.1} parent=27 // pred_region
          %s210 = sand.u32 %s28, 1
          %s211 = scalar_lea.sflag [#allocation3], %s210
          %s212 = sand.u32 %s28, 1
          %s213 = smul.addr %s212, 4
          %s214 = scalar_lea.vmem [#allocation2], %s213
          %s216 = ssub.s32 64, 64
          %217 = vsyncadd %s211, %s216
          %s218 = smul.addr %s18, 64
          %s219 = scalar_lea.hbm %s0, %s218
          %s221 = sshll.u32 %s214, 4
          %s222 = int_to_ptr.vmem [resolvable:$true] %s221
          %224 = dma.hbm_to_vmem [thread:$0]  %s219, 64, %s222, %s211
        $region32: #{tpu_custom_call.1} parent=27 // pred_fallthru
          _
        // Predicated region
        $region33: #{tpu_custom_call.1} parent=27 // pred_check
          %p225 = pneg %p127
        $region34: #{tpu_custom_call.1} parent=27 // pred_check_branch
          %227 = sbr.rel (%p225) target = $region36
        $region35: #{tpu_custom_call.1} parent=27 // pred_region
          %p228 = scmp.lt.s32.totalorder %s18, 1
          %s229 = scalar_select %p228, %s18, 1
          %s230 = scalar_lea.vmem %s4, %s229
        $region36: #{tpu_custom_call.1} parent=27 // pred_fallthru
          _
      $region28: #{tpu_custom_call.1} parent=5 // pred_fallthru
        _
      %p231 = scmp.le.s32.totalorder 1, %s18
      %p232 = scmp.lt.s32.totalorder %s18, 3
      %p233 = pnand %p231, %p232
      %p234 = pneg %p233
      // Predicated region
      $region37: #{tpu_custom_call.1} parent=5 // pred_check
        _
      $region38: #{tpu_custom_call.1} parent=5 // pred_check_branch
        %236 = sbr.rel (%p233) target = $region40
      $region39: #{tpu_custom_call.1} parent=5 // pred_region
        %s237 = ssub.s32 %s18, 1
        %s238 = sand.u32 %s31, 1
        %s239 = scalar_lea.sflag [#allocation3], %s238
        %s240 = sand.u32 %s31, 1
        %s241 = smul.addr %s240, 4
        %s242 = scalar_lea.vmem [#allocation2], %s241
        // Predicated region
        $region41: #{tpu_custom_call.1} parent=39 // pred_check
          %p243 = pneg %p44
        $region42: #{tpu_custom_call.1} parent=39 // pred_check_branch
          %245 = sbr.rel (%p243) target = $region44
        $region43: #{tpu_custom_call.1} parent=39 // pred_region
          %246 = dma.done %s239, 64
        $region44: #{tpu_custom_call.1} parent=39 // pred_fallthru
          _
        // Predicated region
        $region45: #{tpu_custom_call.1} parent=39 // pred_check
          %p247 = pneg %p65
        $region46: #{tpu_custom_call.1} parent=39 // pred_check_branch
          %249 = sbr.rel (%p247) target = $region48
        $region47: #{tpu_custom_call.1} parent=39 // pred_region
          %250 = dma.done [#allocation6], 768
        $region48: #{tpu_custom_call.1} parent=39 // pred_fallthru
          _
        // Predicated region
        $region49: #{tpu_custom_call.1} parent=39 // pred_check
          %p251 = pneg %p86
        $region50: #{tpu_custom_call.1} parent=39 // pred_check_branch
          %253 = sbr.rel (%p251) target = $region52
        $region51: #{tpu_custom_call.1} parent=39 // pred_region
          %254 = dma.done [#allocation6], 1024
        $region52: #{tpu_custom_call.1} parent=39 // pred_fallthru
          _
        %s255 = sand.u32 %s31, 1
        %s256 = scalar_lea.sflag [#allocation3], %s255
        %s257 = sand.u32 %s31, 1
        %s258 = smul.addr %s257, 4
        %s259 = scalar_lea.vmem [#allocation2], %s258
        %p260 = pneg %p44
        %p261 = pneg %p41
        %p262 = pneg %p65
        %p263 = pneg %p62
        %p264 = pneg %p86
        %p265 = pneg %p83
        %p266 = pneg %p107
        %p267 = pneg %p104
        %p268 = scmp.lt.s32.totalorder %s23, 1
        %s269 = scalar_select %p268, %s23, 1
        %s270 = scalar_lea.vmem %s4, %s269
        %p271 = pneg %p133
        %p272 = pneg %p130
        %p273 = pneg %p159
        %p274 = pneg %p156
        %s275 = sand.u32 %s146, 1
        %s276 = scalar_lea.sflag [#allocation4], %s275
        %s277 = sand.u32 %s146, 1
        %s278 = smul.addr %s277, 4
        %s279 = scalar_lea.vmem [#allocation8], %s278
        %p280 = scmp.lt.s32.totalorder %s23, 1
        %s281 = scalar_select %p280, %s23, 1
        %s282 = scalar_lea.vmem %s4, %s281
        %v284 = vld [vmem:[%s242] sm:$0xf]
        %v285 = vld [vmem:[#allocation5] sm:$0xff]
        %v286 = vld [vmem:[#allocation5 + $0x8] sm:$0xf]
        %v287 = vld [vmem:[#allocation5 + $0xc] sm:$0xff]
        %v288 = vld [vmem:[#allocation5 + $0x14] sm:$0xf]
        %v289 = vld [vmem:[#allocation5 + $0x18] sm:$0xff]
        %v290 = vld [vmem:[#allocation5 + $0x20] sm:$0xf]
        %v291 = vld [vmem:[#allocation5 + $0x24] sm:$0xff]
        %v292 = vld [vmem:[#allocation5 + $0x2c] sm:$0xf]
        %v301 = vunpack.c.l.b16 %v285
        %v302 = vunpack.c.h.b16 %v285
        %v303 = vunpack.c.l.b16 %v286
        %v304 = vunpack.c.l.b16 %v287
        %v305 = vunpack.c.h.b16 %v287
        %v306 = vunpack.c.l.b16 %v288
        %v307 = vunpack.c.l.b16 %v289
        %v308 = vunpack.c.h.b16 %v289
        %v309 = vunpack.c.l.b16 %v290
        %v310 = vunpack.c.l.b16 %v291
        %v311 = vunpack.c.h.b16 %v291
        %v312 = vunpack.c.l.b16 %v292
        %v313 = vpack.c.b16 %v304, %v301
        %v314 = vpack.c.b16 %v305, %v302
        %v315 = vpack.c.b16 %v306, %v303
        %v316 = vpack.c.b16 %v310, %v307
        %v317 = vpack.c.b16 %v311, %v308
        %v318 = vpack.c.b16 %v312, %v309
        %vm325 = vcmask 261120
        %v327 = vsel %vm325, %v284, 0
        %329 = vmatprep.subr.bf16.mxu0 %v314
        %330 = vmatpush1.bf16.msra.mxu0 %v313
        %331 = vmatprep.subr.bf16.mxu0 %v317
        %332 = vmatpush1.bf16.msra.mxu0 %v316
        %333 = vmatprep.subr.bf16.mxu0 0
        %334 = vmatpush1.bf16.msra.mxu0 0
        %335 = vmatprep.subr.bf16.mxu0 0
        %336 = vmatpush1.bf16.msra.mxu0 0
        %337 = vmatprep.subr.bf16.mxu0 0
        %338 = vmatpush1.bf16.msra.mxu0 0
        %339 = vmatprep.subr.bf16.mxu0 0
        %340 = vmatpush1.bf16.msra.mxu0 0
        %341 = vmatprep.subr.bf16.mxu0 0
        %342 = vmatpush1.bf16.msra.mxu0 0
        %343 = vmatprep.subr.bf16.mxu0 0
        %344 = vmatpush1.bf16.msra.mxu0 0
        %345 = vmatprep.subr.bf16.mxu0 0
        %346 = vmatpush1.bf16.msra.mxu0 0
        %347 = vmatprep.subr.bf16.mxu0 0
        %348 = vmatpush1.bf16.msra.mxu0 0
        %349 = vmatprep.subr.bf16.mxu0 0
        %350 = vmatpush1.bf16.msra.mxu0 0
        %351 = vmatprep.subr.bf16.mxu0 0
        %352 = vmatpush1.bf16.msra.mxu0 0
        %353 = vmatprep.subr.bf16.mxu0 0
        %354 = vmatpush1.bf16.msra.mxu0 0
        %355 = vmatprep.subr.bf16.mxu0 0
        %356 = vmatpush1.bf16.msra.mxu0 0
        %357 = vmatprep.subr.bf16.mxu0 0
        %358 = vmatpush1.bf16.msra.mxu0 0
        %359 = vmatprep.subr.bf16.mxu0 0
        %360 = vmatpush1.bf16.msra.mxu0 0
        %361 = vmatprep.mubr.bf16.mxu0 0
        %362 = vmatmul.mubr.bf16.gmra.mrb[0].mxu0 %v327
        %v363 = vpop.f32.mrb[0].mxu0
        %v364 = vadd.f32 0.0, %v363
        %v365 = vpop.f32.mrb[0].mxu0
        %v366 = vadd.f32 0.0, %v365
        %v367 = vpop.f32.mrb[0].mxu0
        %v368 = vpop.f32.mrb[0].mxu0
        %369 = vdwg.mxu0
        %370 = vmatprep.subr.bf16.mxu0 0
        %371 = vmatpush1.bf16.msra.mxu0 %v315
        %372 = vmatprep.subr.bf16.mxu0 0
        %373 = vmatpush1.bf16.msra.mxu0 %v318
        %374 = vmatprep.subr.bf16.mxu0 0
        %375 = vmatpush1.bf16.msra.mxu0 0
        %376 = vmatprep.subr.bf16.mxu0 0
        %377 = vmatpush1.bf16.msra.mxu0 0
        %378 = vmatprep.subr.bf16.mxu0 0
        %379 = vmatpush1.bf16.msra.mxu0 0
        %380 = vmatprep.subr.bf16.mxu0 0
        %381 = vmatpush1.bf16.msra.mxu0 0
        %382 = vmatprep.subr.bf16.mxu0 0
        %383 = vmatpush1.bf16.msra.mxu0 0
        %384 = vmatprep.subr.bf16.mxu0 0
        %385 = vmatpush1.bf16.msra.mxu0 0
        %386 = vmatprep.subr.bf16.mxu0 0
        %387 = vmatpush1.bf16.msra.mxu0 0
        %388 = vmatprep.subr.bf16.mxu0 0
        %389 = vmatpush1.bf16.msra.mxu0 0
        %390 = vmatprep.subr.bf16.mxu0 0
        %391 = vmatpush1.bf16.msra.mxu0 0
        %392 = vmatprep.subr.bf16.mxu0 0
        %393 = vmatpush1.bf16.msra.mxu0 0
        %394 = vmatprep.subr.bf16.mxu0 0
        %395 = vmatpush1.bf16.msra.mxu0 0
        %396 = vmatprep.subr.bf16.mxu0 0
        %397 = vmatpush1.bf16.msra.mxu0 0
        %398 = vmatprep.subr.bf16.mxu0 0
        %399 = vmatpush1.bf16.msra.mxu0 0
        %400 = vmatprep.subr.bf16.mxu0 0
        %401 = vmatpush1.bf16.msra.mxu0 0
        %402 = vmatprep.mubr.bf16.mxu0 0
        %403 = vmatmul.mubr.bf16.gmra.mrb[0].mxu0 %v327
        %v404 = vpop.f32.mrb[0].mxu0
        %v405 = vadd.f32 0.0, %v404
        %v406 = vpop.f32.mrb[0].mxu0
        %v407 = vpop.f32.mrb[0].mxu0
        %v408 = vpop.f32.mrb[0].mxu0
        %409 = vdwg.mxu0
        %v410 = vpack.c.bf16 %v364, %v364
        %v411 = vpack.c.bf16 %v366, %v366
        %v412 = vpack.c.bf16 %v405, %v405
        %413 = vmatprep.subr.bf16.mxu0 0
        %414 = vmatpush1.bf16.xpose.msra.mxu0 %v411
        %415 = vmatprep.subr.bf16.mxu0 0
        %416 = vmatpush1.bf16.xpose.msra.mxu0 0
        %417 = vmatprep.subr.bf16.mxu0 0
        %418 = vmatpush1.bf16.xpose.msra.mxu0 0
        %419 = vmatprep.subr.bf16.mxu0 0
        %420 = vmatpush1.bf16.xpose.msra.mxu0 0
        %421 = vmatprep.subr.bf16.mxu0 0
        %422 = vmatpush1.bf16.xpose.msra.mxu0 0
        %423 = vmatprep.subr.bf16.mxu0 0
        %424 = vmatpush1.bf16.xpose.msra.mxu0 0
        %425 = vmatprep.subr.bf16.mxu0 0
        %426 = vmatpush1.bf16.xpose.msra.mxu0 0
        %427 = vmatprep.subr.bf16.mxu0 0
        %428 = vmatpush1.bf16.xpose.msra.mxu0 0
        %429 = vmatprep.subr.bf16.mxu0 0
        %430 = vmatpush1.bf16.xpose.msra.mxu0 0
        %431 = vmatprep.subr.bf16.mxu0 0
        %432 = vmatpush1.bf16.xpose.msra.mxu0 0
        %433 = vmatprep.subr.bf16.mxu0 0
        %434 = vmatpush1.bf16.xpose.msra.mxu0 0
        %435 = vmatprep.subr.bf16.mxu0 0
        %436 = vmatpush1.bf16.xpose.msra.mxu0 0
        %437 = vmatprep.subr.bf16.mxu0 0
        %438 = vmatpush1.bf16.xpose.msra.mxu0 0
        %439 = vmatprep.subr.bf16.mxu0 0
        %440 = vmatpush1.bf16.xpose.msra.mxu0 0
        %441 = vmatprep.subr.bf16.mxu0 0
        %442 = vmatpush1.bf16.xpose.msra.mxu0 0
        %443 = vmatprep.subr.bf16.mxu0 0
        %444 = vmatpush1.bf16.xpose.msra.mxu0 0
        %445 = vmatprep.mubr.bf16.mxu0 0
        %446 = vmatmul.mubr.bf16.gmra.mrb[0].mxu0 %v410
        %v447 = vpop.f32.mrb[0].mxu0
        %v448 = vadd.f32 0.0, %v447
        %v449 = vpop.f32.mrb[0].mxu0
        %v450 = vpop.f32.mrb[0].mxu0
        %v451 = vpop.f32.mrb[0].mxu0
        %452 = vdwg.mxu0
        %v453 = vld [vmem:[%s282] sm:$0x1]
        %v455 = vlaneseq
        %v456 = vshrl.u32 %v455, 7
        %v457 = vsub.s32 0, %v456
        %v458 = vrot.slane %v453, %v457
        %vm460 = vcmp.ne.f32.partialorder %v458, 0.0
        %v461 = vsel %vm460, -30.0, %v448
        %vm462 = vcmask 64512
        %v463 = vsel %vm462, %v461, -inf
        %464 = vmax.xlane.f32.xlu0 %v463
        %v465 = vpop.xlane.xlu0 %464
        %v466 = vsub.f32 %v461, %v465
        %v467 = vmul.f32 %v466, 1.442695
        %v468 = vpow.pop %v467
        %v469 = vsel %vm462, %v468, 0.0
        %470 = vadd.xlane.f32.xlu0 %v469
        %v471 = vpop.xlane.xlu0 %470
        %v472 = vrcp.pop %v471
        %v473 = vmul.f32 %v468, %v472
        %v474 = vsel %vm460, 0.0, %v473
        %v475 = vpack.c.bf16 %v474, %v474
        %v477 = vsel %vm462, %v475, 0
        %vm479 = vcmask 1043456
        %v481 = vsel %vm479, %v412, 0
        %483 = vmatprep.subr.bf16.mxu0 0
        %484 = vmatpush1.bf16.msra.mxu0 %v481
        %485 = vmatprep.subr.bf16.mxu0 0
        %486 = vmatpush1.bf16.msra.mxu0 0
        %487 = vmatprep.subr.bf16.mxu0 0
        %488 = vmatpush1.bf16.msra.mxu0 0
        %489 = vmatprep.subr.bf16.mxu0 0
        %490 = vmatpush1.bf16.msra.mxu0 0
        %491 = vmatprep.subr.bf16.mxu0 0
        %492 = vmatpush1.bf16.msra.mxu0 0
        %493 = vmatprep.subr.bf16.mxu0 0
        %494 = vmatpush1.bf16.msra.mxu0 0
        %495 = vmatprep.subr.bf16.mxu0 0
        %496 = vmatpush1.bf16.msra.mxu0 0
        %497 = vmatprep.subr.bf16.mxu0 0
        %498 = vmatpush1.bf16.msra.mxu0 0
        %499 = vmatprep.subr.bf16.mxu0 0
        %500 = vmatpush1.bf16.msra.mxu0 0
        %501 = vmatprep.subr.bf16.mxu0 0
        %502 = vmatpush1.bf16.msra.mxu0 0
        %503 = vmatprep.subr.bf16.mxu0 0
        %504 = vmatpush1.bf16.msra.mxu0 0
        %505 = vmatprep.subr.bf16.mxu0 0
        %506 = vmatpush1.bf16.msra.mxu0 0
        %507 = vmatprep.subr.bf16.mxu0 0
        %508 = vmatpush1.bf16.msra.mxu0 0
        %509 = vmatprep.subr.bf16.mxu0 0
        %510 = vmatpush1.bf16.msra.mxu0 0
        %511 = vmatprep.subr.bf16.mxu0 0
        %512 = vmatpush1.bf16.msra.mxu0 0
        %513 = vmatprep.subr.bf16.mxu0 0
        %514 = vmatpush1.bf16.msra.mxu0 0
        %515 = vmatprep.mubr.bf16.mxu0 0
        %516 = vmatmul.mubr.bf16.gmra.mrb[0].mxu0 %v477
        %v517 = vpop.f32.mrb[0].mxu0
        %v518 = vadd.f32 0.0, %v517
        %v519 = vpop.f32.mrb[0].mxu0
        %v520 = vpop.f32.mrb[0].mxu0
        %v521 = vpop.f32.mrb[0].mxu0
        %522 = vdwg.mxu0
        %v523 = vpack.c.bf16 %v518, %v518
        %v524 = vld [vmem:[#allocation7] sm:$0xf]
        %v525 = vld [vmem:[#allocation7 + $0x4] sm:$0xf]
        %v526 = vld [vmem:[#allocation7 + $0x8] sm:$0xf]
        %v527 = vld [vmem:[#allocation7 + $0xc] sm:$0xf]
        %v528 = vld [vmem:[#allocation7 + $0x10] sm:$0xf]
        %v529 = vld [vmem:[#allocation7 + $0x14] sm:$0xf]
        %v530 = vld [vmem:[#allocation7 + $0x18] sm:$0xf]
        %v531 = vld [vmem:[#allocation7 + $0x1c] sm:$0xf]
        %v532 = vld [vmem:[#allocation7 + $0x20] sm:$0xf]
        %v533 = vld [vmem:[#allocation7 + $0x24] sm:$0xf]
        %v534 = vld [vmem:[#allocation7 + $0x28] sm:$0xf]
        %v535 = vld [vmem:[#allocation7 + $0x2c] sm:$0xf]
        %v536 = vld [vmem:[#allocation7 + $0x30] sm:$0xf]
        %v537 = vld [vmem:[#allocation7 + $0x34] sm:$0xf]
        %v538 = vld [vmem:[#allocation7 + $0x38] sm:$0xf]
        %v539 = vld [vmem:[#allocation7 + $0x3c] sm:$0xf]
        %v540 = vld [vmem:[%s3] sm:$0x1]
        %v542 = vlaneseq
        %v543 = vshrl.u32 %v542, 7
        %v544 = vsub.s32 0, %v543
        %v545 = vrot.slane %v540, %v544
        %v563 = vunpack.c.l.b16 %v524
        %v564 = vunpack.c.l.b16 %v525
        %v565 = vunpack.c.l.b16 %v526
        %v566 = vunpack.c.l.b16 %v527
        %v567 = vunpack.c.l.b16 %v528
        %v568 = vunpack.c.l.b16 %v529
        %v569 = vunpack.c.l.b16 %v530
        %v570 = vunpack.c.l.b16 %v531
        %v571 = vunpack.c.l.b16 %v532
        %v572 = vunpack.c.l.b16 %v533
        %v573 = vunpack.c.l.b16 %v534
        %v574 = vunpack.c.l.b16 %v535
        %v575 = vunpack.c.l.b16 %v536
        %v576 = vunpack.c.l.b16 %v537
        %v577 = vunpack.c.l.b16 %v538
        %v578 = vunpack.c.l.b16 %v539
        %v579 = vpack.c.b16 %v564, %v563
        %v580 = vpack.c.b16 %v566, %v565
        %v581 = vpack.c.b16 %v568, %v567
        %v582 = vpack.c.b16 %v570, %v569
        %v583 = vpack.c.b16 %v572, %v571
        %v584 = vpack.c.b16 %v574, %v573
        %v585 = vpack.c.b16 %v576, %v575
        %v586 = vpack.c.b16 %v578, %v577
        %595 = vmatprep.subr.bf16.mxu0 0
        %596 = vmatpush1.bf16.msra.mxu0 %v579
        %597 = vmatprep.subr.bf16.mxu0 0
        %598 = vmatpush1.bf16.msra.mxu0 %v580
        %599 = vmatprep.subr.bf16.mxu0 0
        %600 = vmatpush1.bf16.msra.mxu0 %v581
        %601 = vmatprep.subr.bf16.mxu0 0
        %602 = vmatpush1.bf16.msra.mxu0 %v582
        %603 = vmatprep.subr.bf16.mxu0 0
        %604 = vmatpush1.bf16.msra.mxu0 %v583
        %605 = vmatprep.subr.bf16.mxu0 0
        %606 = vmatpush1.bf16.msra.mxu0 %v584
        %607 = vmatprep.subr.bf16.mxu0 0
        %608 = vmatpush1.bf16.msra.mxu0 %v585
        %609 = vmatprep.subr.bf16.mxu0 0
        %610 = vmatpush1.bf16.msra.mxu0 %v586
        %611 = vmatprep.subr.bf16.mxu0 0
        %612 = vmatpush1.bf16.msra.mxu0 0
        %613 = vmatprep.subr.bf16.mxu0 0
        %614 = vmatpush1.bf16.msra.mxu0 0
        %615 = vmatprep.subr.bf16.mxu0 0
        %616 = vmatpush1.bf16.msra.mxu0 0
        %617 = vmatprep.subr.bf16.mxu0 0
        %618 = vmatpush1.bf16.msra.mxu0 0
        %619 = vmatprep.subr.bf16.mxu0 0
        %620 = vmatpush1.bf16.msra.mxu0 0
        %621 = vmatprep.subr.bf16.mxu0 0
        %622 = vmatpush1.bf16.msra.mxu0 0
        %623 = vmatprep.subr.bf16.mxu0 0
        %624 = vmatpush1.bf16.msra.mxu0 0
        %625 = vmatprep.subr.bf16.mxu0 0
        %626 = vmatpush1.bf16.msra.mxu0 0
        %627 = vmatprep.mubr.bf16.mxu0 0
        %628 = vmatmul.mubr.bf16.gmra.mrb[0].mxu0 %v523
        %v629 = vpop.f32.mrb[0].mxu0
        %v630 = vadd.f32 %v545, %v629
        %v631 = vpop.f32.mrb[0].mxu0
        %v632 = vpop.f32.mrb[0].mxu0
        %v633 = vpop.f32.mrb[0].mxu0
        %634 = vdwg.mxu0
        %v635 = vpack.c.bf16 %v630, %v630
        %636 = vst [vmem:[%s279] sm:$0xf] %v635
        %s637 = sand.u32 %s146, 1
        %s638 = scalar_lea.sflag [#allocation4], %s637
        %s639 = sand.u32 %s146, 1
        %s640 = smul.addr %s639, 4
        %s641 = scalar_lea.vmem [#allocation8], %s640
        // Predicated region
        $region53: #{tpu_custom_call.1} parent=39 // pred_check
          %p642 = pneg %p156
        $region54: #{tpu_custom_call.1} parent=39 // pred_check_branch
          %644 = sbr.rel (%p642) target = $region56
        $region55: #{tpu_custom_call.1} parent=39 // pred_region
          %s646 = ssub.s32 64, 64
          %647 = vsyncadd %s638, %s646
          %s648 = smul.addr %s23, 64
          %s649 = scalar_lea.hbm %s5, %s648
          %s651 = sshll.u32 %s641, 4
          %s652 = int_to_ptr.vmem [resolvable:$true] %s651
          %654 = dma.vmem_to_hbm [thread:$0]  %s652, 64, %s649, %s638
        $region56: #{tpu_custom_call.1} parent=39 // pred_fallthru
          _
      $region40: #{tpu_custom_call.1} parent=5 // pred_fallthru
        _
      %p655 = scmp.le.s32.totalorder 2, %s18
      // Predicated region
      $region57: #{tpu_custom_call.1} parent=5 // pred_check
        %p656 = pneg %p655
      $region58: #{tpu_custom_call.1} parent=5 // pred_check_branch
        %658 = sbr.rel (%p656) target = $region60
      $region59: #{tpu_custom_call.1} parent=5 // pred_region
        %s659 = ssub.s32 %s18, 2
        // Predicated region
        $region61: #{tpu_custom_call.1} parent=59 // pred_check
          %p660 = pneg %p162
        $region62: #{tpu_custom_call.1} parent=59 // pred_check_branch
          %662 = sbr.rel (%p660) target = $region64
        $region63: #{tpu_custom_call.1} parent=59 // pred_region
          %s663 = sand.u32 %s147, 1
          %s664 = scalar_lea.sflag [#allocation4], %s663
          %s665 = sand.u32 %s147, 1
          %s666 = smul.addr %s665, 4
          %s667 = scalar_lea.vmem [#allocation8], %s666
          %668 = dma.done %s664, 64
        $region64: #{tpu_custom_call.1} parent=59 // pred_fallthru
          _
      $region60: #{tpu_custom_call.1} parent=5 // pred_fallthru
        _
    $region6: #{tpu_custom_call.1} parent=1 // loop_footer
      %s22 = sadd.s32 1, %s18
    $region7: #{tpu_custom_call.1} parent=1 // loop_footer_branch
      %17 = sbr.rel target = $region3
    $region8: #{tpu_custom_call.1} parent=1 // loop_exit
      _
    %669 = vsyncpa [#allocation3], 1
    %s670 = scalar_lea.sflag [#allocation3], 1
    %671 = vsyncpa %s670, 1
    %672 = vsyncpa [#allocation6], 1
    %673 = vsyncpa [#allocation4], 1
    %s674 = scalar_lea.sflag [#allocation4], 1
    %675 = vsyncpa %s674, 1

</llo_original>
